<compile_context>
chip_gen: v7x
topology: tpu7x:2x2x1
jax: 0.10.0
libtpu: 0.0.40
codegen_flags: <defaults>
</compile_context>

<pallas_src>
from functools import partial

import jax
import jax.numpy as jnp
from jax import lax
from jax.experimental import pallas as pl
from jax.experimental.pallas import tpu as pltpu


def _round_up(x, m):
    return ((x + m - 1) // m) * m


def _pick_tm(rp, block_rows):
    """Row-tile size (multiple of 16).

    Prefers (a) a tile that divides `rp` exactly (no padded tail, so the
    wrapper's unpacking stays metadata-only) and (b) >= 2 grid steps so the
    "parallel" grid axis gives both v7x TensorCores work.
    Returns (tm, rp_padded)."""
    cap = min(int(block_rows), rp)
    cap = max(16, cap - cap % 16)
    if rp % 16 == 0:
        exact = [t for t in range(cap, 15, -16) if rp % t == 0]
        if exact:
            multi = [t for t in exact if rp // t >= 2]
            return (multi[0] if multi else exact[0]), rp
    # Ragged: pad the tail (padded rows are dropped in the wrapper).
    g = -(-rp // cap)
    if g == 1 and rp > 16:
        g = 2                                   # give megacore something to split
    tm = _round_up(-(-rp // g), 16)
    return tm, g * tm


def _rope_kernel_widen(pos_ref, inv_ref, expand_ref, cos_ref, sin_ref, *,
                       scaling, dedup2):
    """Lane-dense (128-lane output rows) paths.

    packed (dedup2=False): pos_ref (TM, pack) holds `pack` logical rows per
      output row; cos/sin computed on the full duplicated 128-lane layout.
    dedup2 (D == 128): pos_ref (TM/2, 2); two logical rows' unique
      half-frequencies share one dense 128-lane compute row (halves the
      transcendental work), then an XLU roll + lane selects expand to the
      (TM, 128) output.
    Position widening = one-hot matmul on the otherwise-idle MXU.
    """
    pos = pos_ref[...].astype(jnp.float32)                    # (rows, groups)
    pos_wide = jnp.dot(pos, expand_ref[...],
                       precision=lax.Precision.HIGHEST,       # keep ints exact
                       preferred_element_type=jnp.float32)    # (rows, 128)
    freqs = pos_wide * inv_ref[...]                           # (rows, 128)
    c = jnp.cos(freqs)
    s = jnp.sin(freqs)
    if scaling != 1.0:
        c = c * scaling
        s = s * scaling
    if not dedup2:
        cos_ref[...] = c.astype(cos_ref.dtype)
        sin_ref[...] = s.astype(sin_ref.dtype)
    else:
        rows = pos.shape[0]                                   # == TM // 2
        low = lax.broadcasted_iota(jnp.int32, (rows, 128), 1) < 64
        c_r = pltpu.roll(c, 64, 1)                            # swap lane halves (XLU)
        s_r = pltpu.roll(s, 64, 1)
        # logical row r        -> [x[r, 0:64],  x[r, 0:64]]
        # logical row r + TM/2 -> [x[r, 64:128], x[r, 64:128]]
        cos_ref[0:rows, :] = jnp.where(low, c, c_r).astype(cos_ref.dtype)
        cos_ref[rows:2 * rows, :] = jnp.where(low, c_r, c).astype(cos_ref.dtype)
        sin_ref[0:rows, :] = jnp.where(low, s, s_r).astype(sin_ref.dtype)
        sin_ref[rows:2 * rows, :] = jnp.where(low, s_r, s).astype(sin_ref.dtype)


def _rope_kernel_simple(pos_ref, inv_ref, cos_ref, sin_ref, *,
                        scaling, concat_halves):
    """D >= 128 paths, one logical row per output row.

    concat_halves=True (half >= 128): compute on the (TM, half) half-domain
      (full-lane layout -> genuinely halves EUP/VALU work) then lane-concat.
    concat_halves=False: compute directly on the duplicated (TM, D) layout
      (a half-width intermediate would be masked-lane and save nothing).
    """
    pos = pos_ref[...].astype(jnp.float32)     # (TM, 1)
    freqs = pos * inv_ref[...]
    c = jnp.cos(freqs)
    s = jnp.sin(freqs)
    if scaling != 1.0:
        c = c * scaling
        s = s * scaling
    if concat_halves:
        c = jnp.concatenate([c, c], axis=-1)
        s = jnp.concatenate([s, s], axis=-1)
    cos_ref[...] = c.astype(cos_ref.dtype)
    sin_ref[...] = s.astype(sin_ref.dtype)


def _rope_table(position_ids, inv_freq, attention_scaling, out_dtype,
                block_rows):
    B, S = position_ids.shape
    half = int(inv_freq.shape[0])
    D = 2 * half
    R = B * S
    scaling = float(attention_scaling)
    itemsize = jnp.dtype(out_dtype).itemsize

    # Path selection.
    if D < 128 and 128 % D == 0:
        mode, pack = "packed", 128 // D          # pack rows per 128-lane row
    elif D == 128:
        mode, pack = "dedup2", 1                 # true half-domain dedup
    elif half >= 128:
        mode, pack = "half_concat", 1            # compute on half, concat
    else:
        mode, pack = "dup", 1                    # compute on duplicated width

    rp = -(-R // pack)                           # packed rows before padding
    tm, rp_pad = _pick_tm(rp, block_rows)
    grid = rp_pad // tm

    pos_flat = position_ids.reshape(R).astype(jnp.int32)
    pad = rp_pad * pack - R
    if pad:
        pos_flat = jnp.pad(pos_flat, (0, pad))

    inv_half = inv_freq.astype(jnp.float32).reshape(1, half)
    inv_dup = jnp.concatenate([inv_half, inv_half], axis=-1)    # (1, D)

    if mode in ("packed", "dedup2"):
        if mode == "packed":
            pos2d = pos_flat.reshape(rp_pad, pack)
            groups, seg, pos_rows = pack, D, tm
            inv_row = jnp.tile(inv_dup, (1, pack))               # (1, 128)
        else:
            # Per-tile rearrangement: row r of tile g holds positions
            # (g*tm + r, g*tm + tm//2 + r) so two logical rows share one
            # dense 128-lane compute row.
            pos2d = (pos_flat.reshape(grid, 2, tm // 2)
                     .transpose(0, 2, 1)
                     .reshape(grid * (tm // 2), 2))
            groups, seg, pos_rows = 2, half, tm // 2
            inv_row = inv_dup                                    # (1, 128)
        # One-hot widening matrix for the MXU: expand[j, lane] = (lane//seg == j).
        expand = (jnp.arange(128, dtype=jnp.int32)[None, :] // seg
                  == jnp.arange(groups, dtype=jnp.int32)[:, None]
                  ).astype(jnp.float32)                          # (groups, 128)

        comp = half if mode == "dedup2" else D                   # lanes per row per fn
        cost = pl.CostEstimate(
            flops=int(R * (2 * comp + (2 * D if scaling != 1.0 else 0))),
            transcendentals=int(2 * R * comp),
            bytes_accessed=int(2 * R * D * itemsize + R * 4 + 1024),
        )
        kernel = partial(_rope_kernel_widen, scaling=scaling,
                         dedup2=(mode == "dedup2"))
        cos_p, sin_p = pl.pallas_call(
            kernel,
            out_shape=(jax.ShapeDtypeStruct((rp_pad, 128), out_dtype),
                       jax.ShapeDtypeStruct((rp_pad, 128), out_dtype)),
            grid=(grid,),
            in_specs=[
                pl.BlockSpec((pos_rows, groups), lambda i: (i, 0)),
                pl.BlockSpec((1, 128), lambda i: (0, 0)),
                pl.BlockSpec((groups, 128), lambda i: (0, 0)),
            ],
            out_specs=(pl.BlockSpec((tm, 128), lambda i: (i, 0)),
                       pl.BlockSpec((tm, 128), lambda i: (i, 0))),
            compiler_params=pltpu.CompilerParams(
                dimension_semantics=("parallel",)),
            cost_estimate=cost,
        )(pos2d, inv_row, expand)
    else:
        pos2d = pos_flat.reshape(rp_pad, 1)
        if mode == "half_concat":
            inv_row, comp = inv_half, half
        else:
            inv_row, comp = inv_dup, D
        cost = pl.CostEstimate(
            flops=int(R * (comp + (2 * D if scaling != 1.0 else 0))),
            transcendentals=int(2 * R * comp),
            bytes_accessed=int(2 * R * D * itemsize + R * 4
                               + inv_row.shape[1] * 4),
        )
        kernel = partial(_rope_kernel_simple, scaling=scaling,
                         concat_halves=(mode == "half_concat"))
        cos_p, sin_p = pl.pallas_call(
            kernel,
            out_shape=(jax.ShapeDtypeStruct((rp_pad, D), out_dtype),
                       jax.ShapeDtypeStruct((rp_pad, D), out_dtype)),
            grid=(grid,),
            in_specs=[
                pl.BlockSpec((tm, 1), lambda i: (i, 0)),
                pl.BlockSpec((1, inv_row.shape[1]), lambda i: (0, 0)),
            ],
            out_specs=(pl.BlockSpec((tm, D), lambda i: (i, 0)),
                       pl.BlockSpec((tm, D), lambda i: (i, 0))),
            compiler_params=pltpu.CompilerParams(
                dimension_semantics=("parallel",)),
            cost_estimate=cost,
        )(pos2d, inv_row)

    def unpack(p):
        flat = p.reshape(rp_pad * pack, D)
        if rp_pad * pack != R:
            flat = flat[:R]
        return flat.reshape(B, S, D)

    return unpack(cos_p), unpack(sin_p)


def _rows_all_equal(position_ids):
    """True iff all batch rows are identical (only checked on concrete data)."""
    if position_ids.shape[0] <= 1:
        return False
    try:
        return bool(jnp.all(position_ids == position_ids[:1]))
    except jax.errors.ConcretizationTypeError:
        return False     # tracing under jit: skip the fast path


def llama_rotary_embedding(x, position_ids, inv_freq, attention_scaling=1.0,
                           block_rows=2048):
    """Pallas-TPU equivalent of LlamaRotaryEmbedding.forward (default rope_type).

    Returns (cos, sin), each (B, S, D) with dtype == x.dtype, D = 2*len(inv_freq).
    """
    B, S = position_ids.shape
    out_dtype = x.dtype

    # Batch fast path: the standard case is identical position rows across the
    # batch -> compute the (1, S, D) table once and broadcast (B-fold saving
    # in transcendentals, VALU work and HBM writes).
    if B > 1 and _rows_all_equal(position_ids):
        cos1, sin1 = _rope_table(position_ids[:1], inv_freq, attention_scaling,
                                 out_dtype, block_rows)
        D = cos1.shape[-1]
        return (jnp.broadcast_to(cos1, (B, S, D)),
                jnp.broadcast_to(sin1, (B, S, D)))

    return _rope_table(position_ids, inv_freq, attention_scaling,
                       out_dtype, block_rows)


def make_default_inv_freq(dim, base=10000.0):
    # ROPE_INIT_FUNCTIONS['default']: inv_freq = 1 / base**(arange(0, dim, 2)/dim)
    return 1.0 / (base ** (jnp.arange(0, dim, 2, dtype=jnp.float32) / dim))


def _reference(x, position_ids, inv_freq, attention_scaling):
    pos_f = position_ids.astype(jnp.float32)
    freqs = pos_f[:, :, None] * inv_freq.astype(jnp.float32)[None, None, :]
    emb = jnp.concatenate([freqs, freqs], axis=-1)
    cos = (jnp.cos(emb) * attention_scaling).astype(x.dtype)
    sin = (jnp.sin(emb) * attention_scaling).astype(x.dtype)
    return cos, sin


if __name__ == "__main__":
    key = jax.random.PRNGKey(0)

    # --- Test 1: D=32 lane-packed path (4 rows / 128-lane output row),
    #             distinct batch rows so the packed kernel itself runs. ---
    B, S, D = 2, 8, 32
    x = jax.random.normal(key, (B, S, D), dtype=jnp.float32)  # only dtype is used
    pos = jnp.stack([jnp.arange(S, dtype=jnp.int32),
                     jnp.arange(S, dtype=jnp.int32) + 5], axis=0)
    inv = make_default_inv_freq(D)
    cos, sin = llama_rotary_embedding(x, pos, inv, 1.0)
    jax.block_until_ready((cos, sin))
    cr, sr = _reference(x, pos, inv, 1.0)
    assert cos.shape == (B, S, D) and sin.shape == (B, S, D)
    assert cos.dtype == x.dtype and sin.dtype == x.dtype
    assert jnp.allclose(cos, cr, atol=1e-5, rtol=1e-5)
    assert jnp.allclose(sin, sr, atol=1e-5, rtol=1e-5)

    # --- Test 2: D=128 half-domain dedup path, multi-tile grid, scaling 0.5. ---
    B2, S2, D2 = 2, 64, 128
    x2 = jax.random.normal(key, (B2, S2, D2), dtype=jnp.float32)
    pos2 = jnp.stack([jnp.arange(S2, dtype=jnp.int32),
                      jnp.arange(S2, dtype=jnp.int32) + 17], axis=0)
    inv2 = make_default_inv_freq(D2)
    cos2, sin2 = llama_rotary_embedding(x2, pos2, inv2, 0.5, block_rows=16)
    jax.block_until_ready((cos2, sin2))
    c2r, s2r = _reference(x2, pos2, inv2, 0.5)
    assert jnp.allclose(cos2, c2r, atol=1e-5, rtol=1e-5)
    assert jnp.allclose(sin2, s2r, atol=1e-5, rtol=1e-5)

    # --- Test 3: batch fast path (identical rows) + half>=128 concat path. ---
    B3, S3, D3 = 2, 16, 256
    x3 = jax.random.normal(key, (B3, S3, D3), dtype=jnp.float32)
    pos3 = jnp.broadcast_to(jnp.arange(S3, dtype=jnp.int32)[None, :], (B3, S3))
    inv3 = make_default_inv_freq(D3)
    cos3, sin3 = llama_rotary_embedding(x3, pos3, inv3, 1.0)
    jax.block_until_ready((cos3, sin3))
    c3r, s3r = _reference(x3, pos3, inv3, 1.0)
    assert cos3.shape == (B3, S3, D3)
    assert jnp.allclose(cos3, c3r, atol=1e-5, rtol=1e-5)
    assert jnp.allclose(sin3, s3r, atol=1e-5, rtol=1e-5)

    print("KERNEL_OK")
</pallas_src>

<mosaic_0001>
module attributes {stable_mosaic.version = 11 : i64} {
  func.func @_rope_kernel_widen(%arg0: i32, %arg1: memref<16x4xi32, #tpu.memory_space<vmem>>, %arg2: memref<1x128xf32, #tpu.memory_space<vmem>>, %arg3: memref<4x128xf32, #tpu.memory_space<vmem>>, %arg4: memref<16x128xf32, #tpu.memory_space<vmem>>, %arg5: memref<16x128xf32, #tpu.memory_space<vmem>>) attributes {dimension_semantics = [#tpu.dimension_semantics<parallel>], iteration_bounds = array<i64: 1>, scalar_prefetch = 0 : i64, scratch_operands = 0 : i64, tpu.core_type = #tpu.core_type<tc>, window_params = [{transform_indices = @transform_0, window_bounds = array<i64: 16, 4>}, {pipeline_mode = #tpu.pipeline_mode<synchronous>, transform_indices = @transform_1, window_bounds = array<i64: 1, 128>}, {pipeline_mode = #tpu.pipeline_mode<synchronous>, transform_indices = @transform_2, window_bounds = array<i64: 4, 128>}, {transform_indices = @transform_3, window_bounds = array<i64: 16, 128>}, {transform_indices = @transform_4, window_bounds = array<i64: 16, 128>}]} {
    %c0 = arith.constant 0 : index
    %c0_0 = arith.constant 0 : index
    %0 = vector.load %arg1[%c0, %c0_0] : memref<16x4xi32, #tpu.memory_space<vmem>>, vector<16x4xi32>
    %1 = arith.sitofp %0 : vector<16x4xi32> to vector<16x4xf32>
    %c0_1 = arith.constant 0 : index
    %c0_2 = arith.constant 0 : index
    %2 = vector.load %arg3[%c0_1, %c0_2] : memref<4x128xf32, #tpu.memory_space<vmem>>, vector<4x128xf32>
    %cst = arith.constant dense<0.000000e+00> : vector<16x128xf32>
    %3 = tpu.matmul %1, %2, %cst {dimension_numbers = #tpu.dot_dimension_numbers<[1], [0], [0], [1], [0, 0, 1, 1], [], []>, precision = #tpu.contract_precision<fp32>} : vector<16x4xf32>, vector<4x128xf32>, vector<16x128xf32> -> vector<16x128xf32>
    %c0_3 = arith.constant 0 : index
    %c0_4 = arith.constant 0 : index
    %4 = vector.load %arg2[%c0_3, %c0_4] : memref<1x128xf32, #tpu.memory_space<vmem>>, vector<1x128xf32>
    %5 = vector.broadcast %4 : vector<1x128xf32> to vector<16x128xf32>
    %6 = arith.mulf %3, %5 : vector<16x128xf32>
    %7 = math.cos %6 : vector<16x128xf32>
    %8 = math.sin %6 : vector<16x128xf32>
    %c0_5 = arith.constant 0 : index
    %c0_6 = arith.constant 0 : index
    %9 = vector.load %arg4[%c0_5, %c0_6] : memref<16x128xf32, #tpu.memory_space<vmem>>, vector<16x128xf32>
    tpu.vector_store %arg4[%c0_5, %c0_6], %7 {strides = array<i32>} : memref<16x128xf32, #tpu.memory_space<vmem>>, vector<16x128xf32>,
    %c0_7 = arith.constant 0 : index
    %c0_8 = arith.constant 0 : index
    %10 = vector.load %arg5[%c0_7, %c0_8] : memref<16x128xf32, #tpu.memory_space<vmem>>, vector<16x128xf32>
    tpu.vector_store %arg5[%c0_7, %c0_8], %8 {strides = array<i32>} : memref<16x128xf32, #tpu.memory_space<vmem>>, vector<16x128xf32>,
    return
  }
  func.func @transform_0(%arg0: i32) -> (i32, i32) {
    %c0_i32 = arith.constant 0 : i32
    %c0_i32_0 = arith.constant 0 : i32
    return %arg0, %c0_i32 : i32, i32
  }
  func.func @transform_1(%arg0: i32) -> (i32, i32) {
    %c0_i32 = arith.constant 0 : i32
    %c0_i32_0 = arith.constant 0 : i32
    %c0_i32_1 = arith.constant 0 : i32
    return %c0_i32, %c0_i32_0 : i32, i32
  }
  func.func @transform_2(%arg0: i32) -> (i32, i32) {
    %c0_i32 = arith.constant 0 : i32
    %c0_i32_0 = arith.constant 0 : i32
    %c0_i32_1 = arith.constant 0 : i32
    return %c0_i32, %c0_i32_0 : i32, i32
  }
  func.func @transform_3(%arg0: i32) -> (i32, i32) {
    %c0_i32 = arith.constant 0 : i32
    %c0_i32_0 = arith.constant 0 : i32
    return %arg0, %c0_i32 : i32, i32
  }
  func.func @transform_4(%arg0: i32) -> (i32, i32) {
    %c0_i32 = arith.constant 0 : i32
    %c0_i32_0 = arith.constant 0 : i32
    return %arg0, %c0_i32 : i32, i32
  }
}

</mosaic_0001>

<llo_original>
// kernel: tpu_custom_call.1
$region0: #{tpu_custom_call.1}
  #allocation0 [shape = 'u32[]', space=smem, size = 0x4, offset = 0x4, fixed_abs, tag = 'smem constant byte address 0x4 - core index']
  #allocation1 [shape = 'u32[144,128]{1,0:T(1,128)}', space=vmem, size = 0x12000, scoped, tag = 'internal scratch']
  %s0 = inlined_call_operand.vmem [shape: s32[16,4], index: 0, kind: input, shape index: {}]
  %s1 = inlined_call_operand.vmem [shape: f32[1,128], index: 1, kind: input, shape index: {}]
  %s2 = inlined_call_operand.vmem [shape: f32[4,128], index: 2, kind: input, shape index: {}]
  %s3 = inlined_call_operand.hbm [shape: f32[16,128], index: 3, kind: output, shape index: {0}]
  %s4 = inlined_call_operand.hbm [shape: f32[16,128], index: 4, kind: output, shape index: {1}]
  %5 = xla_tuple %s3, %s4
  %s6 = sld [smem:[#allocation0]]
  $region30: #{tpu_custom_call.1} parent=0
    _
  %s8 = ssub.s32 1, %s6
  %s9 = scalar_select 0, %s8, %s6
  $region1: #{tpu_custom_call.1} parent=0
    #allocation2 [shape = 'u8[8192]{0}', space=vmem, size = 0x2000, scoped, tag = 'output window, operand 0, single buffered']
    #allocation3 [shape = 's32[1]{0}', space=sflag, size = 0x4, scoped, tag = 'scoped memory for tpu_custom_call.1']
    #allocation4 [shape = 'u8[8192]{0}', space=vmem, size = 0x2000, scoped, tag = 'output window, operand 1, single buffered']
    #allocation5 [shape = 's32[1]{0}', space=sflag, size = 0x4, scoped, tag = 'scoped memory for tpu_custom_call.1']
    %10 = vsyncpa [#allocation3], 0
    %11 = vsyncpa [#allocation5], 0
    // Predicated region
    $region2: #{tpu_custom_call.1} parent=1 // pred_check
      _
    $region3: #{tpu_custom_call.1} parent=1 // pred_check_branch
      %13 = sbr.rel (0) target = $region5
    $region4: #{tpu_custom_call.1} parent=1 // pred_region
      _
    $region5: #{tpu_custom_call.1} parent=1 // pred_fallthru
      _
    // Predicated region
    $region6: #{tpu_custom_call.1} parent=1 // pred_check
      _
    $region7: #{tpu_custom_call.1} parent=1 // pred_check_branch
      %15 = sbr.rel (0) target = $region9
    $region8: #{tpu_custom_call.1} parent=1 // pred_region
      _
    $region9: #{tpu_custom_call.1} parent=1 // pred_fallthru
      _
    // Predicated region
    $region10: #{tpu_custom_call.1} parent=1 // pred_check
      _
    $region11: #{tpu_custom_call.1} parent=1 // pred_check_branch
      %17 = sbr.rel (0) target = $region13
    $region12: #{tpu_custom_call.1} parent=1 // pred_region
      _
    $region13: #{tpu_custom_call.1} parent=1 // pred_fallthru
      _
    %v18 = vld [vmem:[%s0] sm:$0xff]
    %v19 = vld [vmem:[%s0 + $0x8] sm:$0xff]
    %v20 = vcvt.s32.f32 %v18
    %v21 = vcvt.s32.f32 %v19
    %v22 = vld [vmem:[%s2] sm:$0xf]
    %vm23 = vcmask 31744
    %v25 = vsel %vm23, %v20, 0
    %v28 = vsel %vm23, %v21, 0
    %vm30 = vcmask 1043456
    %v32 = vsel %vm30, %v22, 0
    %34 = vmatprep.subr.mxu0 0.0
    %v35 = vand.u32 %v32, 4294901760
    %36 = vmatpush1.msra.mxu0 %v35
    %37 = vmatprep.subr.mxu0 0.0
    %38 = vmatpush1.msra.mxu0 0.0
    %39 = vmatprep.subr.mxu0 0.0
    %40 = vmatpush1.msra.mxu0 0.0
    %41 = vmatprep.subr.mxu0 0.0
    %42 = vmatpush1.msra.mxu0 0.0
    %43 = vmatprep.subr.mxu0 0.0
    %44 = vmatpush1.msra.mxu0 0.0
    %45 = vmatprep.subr.mxu0 0.0
    %46 = vmatpush1.msra.mxu0 0.0
    %47 = vmatprep.subr.mxu0 0.0
    %48 = vmatpush1.msra.mxu0 0.0
    %49 = vmatprep.subr.mxu0 0.0
    %50 = vmatpush1.msra.mxu0 0.0
    %51 = vmatprep.subr.mxu0 0.0
    %52 = vmatpush1.msra.mxu0 0.0
    %53 = vmatprep.subr.mxu0 0.0
    %54 = vmatpush1.msra.mxu0 0.0
    %55 = vmatprep.subr.mxu0 0.0
    %56 = vmatpush1.msra.mxu0 0.0
    %57 = vmatprep.subr.mxu0 0.0
    %58 = vmatpush1.msra.mxu0 0.0
    %59 = vmatprep.subr.mxu0 0.0
    %60 = vmatpush1.msra.mxu0 0.0
    %61 = vmatprep.subr.mxu0 0.0
    %62 = vmatpush1.msra.mxu0 0.0
    %63 = vmatprep.subr.mxu0 0.0
    %64 = vmatpush1.msra.mxu0 0.0
    %65 = vmatprep.subr.mxu0 0.0
    %66 = vmatpush1.msra.mxu0 0.0
    %67 = vmatprep.subr.mxu0 0.0
    %68 = vmatpush1.msra.mxu0 0.0
    %69 = vmatprep.subr.mxu0 0.0
    %70 = vmatpush1.msra.mxu0 0.0
    %71 = vmatprep.subr.mxu0 0.0
    %72 = vmatpush1.msra.mxu0 0.0
    %73 = vmatprep.subr.mxu0 0.0
    %74 = vmatpush1.msra.mxu0 0.0
    %75 = vmatprep.subr.mxu0 0.0
    %76 = vmatpush1.msra.mxu0 0.0
    %77 = vmatprep.subr.mxu0 0.0
    %78 = vmatpush1.msra.mxu0 0.0
    %79 = vmatprep.subr.mxu0 0.0
    %80 = vmatpush1.msra.mxu0 0.0
    %81 = vmatprep.subr.mxu0 0.0
    %82 = vmatpush1.msra.mxu0 0.0
    %83 = vmatprep.subr.mxu0 0.0
    %84 = vmatpush1.msra.mxu0 0.0
    %85 = vmatprep.subr.mxu0 0.0
    %86 = vmatpush1.msra.mxu0 0.0
    %87 = vmatprep.subr.mxu0 0.0
    %88 = vmatpush1.msra.mxu0 0.0
    %89 = vmatprep.subr.mxu0 0.0
    %90 = vmatpush1.msra.mxu0 0.0
    %91 = vmatprep.subr.mxu0 0.0
    %92 = vmatpush1.msra.mxu0 0.0
    %93 = vmatprep.subr.mxu0 0.0
    %94 = vmatpush1.msra.mxu0 0.0
    %95 = vmatprep.subr.mxu0 0.0
    %96 = vmatpush1.msra.mxu0 0.0
    %97 = vmatprep.subr.mxu0 0.0
    %98 = vmatpush1.msra.mxu0 0.0
    %99 = vmatprep.mubr.f32.mxu0 0.0
    %v100 = vand.u32 %v25, 4294901760
    %v101 = vsub.f32 %v25, %v100
    %v102 = vand.u32 %v101, 4294901760
    %v103 = vsub.f32 %v101, %v102
    %v104 = vand.u32 %v103, 4294901760
    %105 = vmatmul.mubr.f32.gmra.mrb[0].mxu0 %v104
    %v106 = vpop.f32.mrb[0].mxu0
    %v107 = vadd.f32 0.0, %v106
    %v108 = vpop.f32.mrb[0].mxu0
    %109 = vmatprep.mubr.f32.mxu0 0.0
    %v110 = vand.u32 %v28, 4294901760
    %v111 = vsub.f32 %v28, %v110
    %v112 = vand.u32 %v111, 4294901760
    %v113 = vsub.f32 %v111, %v112
    %v114 = vand.u32 %v113, 4294901760
    %115 = vmatmul.mubr.f32.gmra.mrb[0].mxu0 %v114
    %v116 = vpop.f32.mrb[0].mxu0
    %v117 = vadd.f32 0.0, %v116
    %v118 = vpop.f32.mrb[0].mxu0
    %119 = vdwg.mxu0
    %120 = vmatprep.subr.mxu0 0.0
    %v121 = vand.u32 %v32, 4294901760
    %v122 = vsub.f32 %v32, %v121
    %v123 = vand.u32 %v122, 4294901760
    %v124 = vsub.f32 %v122, %v123
    %v125 = vand.u32 %v124, 4294901760
    %126 = vmatpush1.msra.mxu0 %v125
    %127 = vmatprep.subr.mxu0 0.0
    %128 = vmatpush1.msra.mxu0 0.0
    %129 = vmatprep.subr.mxu0 0.0
    %130 = vmatpush1.msra.mxu0 0.0
    %131 = vmatprep.subr.mxu0 0.0
    %132 = vmatpush1.msra.mxu0 0.0
    %133 = vmatprep.subr.mxu0 0.0
    %134 = vmatpush1.msra.mxu0 0.0
    %135 = vmatprep.subr.mxu0 0.0
    %136 = vmatpush1.msra.mxu0 0.0
    %137 = vmatprep.subr.mxu0 0.0
    %138 = vmatpush1.msra.mxu0 0.0
    %139 = vmatprep.subr.mxu0 0.0
    %140 = vmatpush1.msra.mxu0 0.0
    %141 = vmatprep.subr.mxu0 0.0
    %142 = vmatpush1.msra.mxu0 0.0
    %143 = vmatprep.subr.mxu0 0.0
    %144 = vmatpush1.msra.mxu0 0.0
    %145 = vmatprep.subr.mxu0 0.0
    %146 = vmatpush1.msra.mxu0 0.0
    %147 = vmatprep.subr.mxu0 0.0
    %148 = vmatpush1.msra.mxu0 0.0
    %149 = vmatprep.subr.mxu0 0.0
    %150 = vmatpush1.msra.mxu0 0.0
    %151 = vmatprep.subr.mxu0 0.0
    %152 = vmatpush1.msra.mxu0 0.0
    %153 = vmatprep.subr.mxu0 0.0
    %154 = vmatpush1.msra.mxu0 0.0
    %155 = vmatprep.subr.mxu0 0.0
    %156 = vmatpush1.msra.mxu0 0.0
    %157 = vmatprep.subr.mxu0 0.0
    %158 = vmatpush1.msra.mxu0 0.0
    %159 = vmatprep.subr.mxu0 0.0
    %160 = vmatpush1.msra.mxu0 0.0
    %161 = vmatprep.subr.mxu0 0.0
    %162 = vmatpush1.msra.mxu0 0.0
    %163 = vmatprep.subr.mxu0 0.0
    %164 = vmatpush1.msra.mxu0 0.0
    %165 = vmatprep.subr.mxu0 0.0
    %166 = vmatpush1.msra.mxu0 0.0
    %167 = vmatprep.subr.mxu0 0.0
    %168 = vmatpush1.msra.mxu0 0.0
    %169 = vmatprep.subr.mxu0 0.0
    %170 = vmatpush1.msra.mxu0 0.0
    %171 = vmatprep.subr.mxu0 0.0
    %172 = vmatpush1.msra.mxu0 0.0
    %173 = vmatprep.subr.mxu0 0.0
    %174 = vmatpush1.msra.mxu0 0.0
    %175 = vmatprep.subr.mxu0 0.0
    %176 = vmatpush1.msra.mxu0 0.0
    %177 = vmatprep.subr.mxu0 0.0
    %178 = vmatpush1.msra.mxu0 0.0
    %179 = vmatprep.subr.mxu0 0.0
    %180 = vmatpush1.msra.mxu0 0.0
    %181 = vmatprep.subr.mxu0 0.0
    %182 = vmatpush1.msra.mxu0 0.0
    %183 = vmatprep.subr.mxu0 0.0
    %184 = vmatpush1.msra.mxu0 0.0
    %185 = vmatprep.subr.mxu0 0.0
    %186 = vmatpush1.msra.mxu0 0.0
    %187 = vmatprep.subr.mxu0 0.0
    %188 = vmatpush1.msra.mxu0 0.0
    %189 = vmatprep.mubr.f32.mxu0 0.0
    %v190 = vand.u32 %v25, 4294901760
    %191 = vmatmul.mubr.f32.gmra.mrb[0].mxu0 %v190
    %v192 = vpop.f32.mrb[0].mxu0
    %v193 = vadd.f32 %v107, %v192
    %v194 = vpop.f32.mrb[0].mxu0
    %195 = vmatprep.mubr.f32.mxu0 0.0
    %v196 = vand.u32 %v28, 4294901760
    %197 = vmatmul.mubr.f32.gmra.mrb[0].mxu0 %v196
    %v198 = vpop.f32.mrb[0].mxu0
    %v199 = vadd.f32 %v117, %v198
    %v200 = vpop.f32.mrb[0].mxu0
    %201 = vdwg.mxu0
    %202 = vmatprep.subr.mxu0 0.0
    %v203 = vand.u32 %v32, 4294901760
    %v204 = vsub.f32 %v32, %v203
    %205 = vmatpush1.msra.mxu0 %v204
    %206 = vmatprep.subr.mxu0 0.0
    %207 = vmatpush1.msra.mxu0 0.0
    %208 = vmatprep.subr.mxu0 0.0
    %209 = vmatpush1.msra.mxu0 0.0
    %210 = vmatprep.subr.mxu0 0.0
    %211 = vmatpush1.msra.mxu0 0.0
    %212 = vmatprep.subr.mxu0 0.0
    %213 = vmatpush1.msra.mxu0 0.0
    %214 = vmatprep.subr.mxu0 0.0
    %215 = vmatpush1.msra.mxu0 0.0
    %216 = vmatprep.subr.mxu0 0.0
    %217 = vmatpush1.msra.mxu0 0.0
    %218 = vmatprep.subr.mxu0 0.0
    %219 = vmatpush1.msra.mxu0 0.0
    %220 = vmatprep.subr.mxu0 0.0
    %221 = vmatpush1.msra.mxu0 0.0
    %222 = vmatprep.subr.mxu0 0.0
    %223 = vmatpush1.msra.mxu0 0.0
    %224 = vmatprep.subr.mxu0 0.0
    %225 = vmatpush1.msra.mxu0 0.0
    %226 = vmatprep.subr.mxu0 0.0
    %227 = vmatpush1.msra.mxu0 0.0
    %228 = vmatprep.subr.mxu0 0.0
    %229 = vmatpush1.msra.mxu0 0.0
    %230 = vmatprep.subr.mxu0 0.0
    %231 = vmatpush1.msra.mxu0 0.0
    %232 = vmatprep.subr.mxu0 0.0
    %233 = vmatpush1.msra.mxu0 0.0
    %234 = vmatprep.subr.mxu0 0.0
    %235 = vmatpush1.msra.mxu0 0.0
    %236 = vmatprep.subr.mxu0 0.0
    %237 = vmatpush1.msra.mxu0 0.0
    %238 = vmatprep.subr.mxu0 0.0
    %239 = vmatpush1.msra.mxu0 0.0
    %240 = vmatprep.subr.mxu0 0.0
    %241 = vmatpush1.msra.mxu0 0.0
    %242 = vmatprep.subr.mxu0 0.0
    %243 = vmatpush1.msra.mxu0 0.0
    %244 = vmatprep.subr.mxu0 0.0
    %245 = vmatpush1.msra.mxu0 0.0
    %246 = vmatprep.subr.mxu0 0.0
    %247 = vmatpush1.msra.mxu0 0.0
    %248 = vmatprep.subr.mxu0 0.0
    %249 = vmatpush1.msra.mxu0 0.0
    %250 = vmatprep.subr.mxu0 0.0
    %251 = vmatpush1.msra.mxu0 0.0
    %252 = vmatprep.subr.mxu0 0.0
    %253 = vmatpush1.msra.mxu0 0.0
    %254 = vmatprep.subr.mxu0 0.0
    %255 = vmatpush1.msra.mxu0 0.0
    %256 = vmatprep.subr.mxu0 0.0
    %257 = vmatpush1.msra.mxu0 0.0
    %258 = vmatprep.subr.mxu0 0.0
    %259 = vmatpush1.msra.mxu0 0.0
    %260 = vmatprep.subr.mxu0 0.0
    %261 = vmatpush1.msra.mxu0 0.0
    %262 = vmatprep.subr.mxu0 0.0
    %263 = vmatpush1.msra.mxu0 0.0
    %264 = vmatprep.subr.mxu0 0.0
    %265 = vmatpush1.msra.mxu0 0.0
    %266 = vmatprep.subr.mxu0 0.0
    %267 = vmatpush1.msra.mxu0 0.0
    %268 = vmatprep.mubr.f32.mxu0 0.0
    %v269 = vand.u32 %v25, 4294901760
    %v270 = vsub.f32 %v25, %v269
    %271 = vmatmul.mubr.f32.gmra.mrb[0].mxu0 %v270
    %v272 = vpop.f32.mrb[0].mxu0
    %v273 = vadd.f32 %v193, %v272
    %v274 = vpop.f32.mrb[0].mxu0
    %275 = vmatprep.mubr.f32.mxu0 0.0
    %v276 = vand.u32 %v28, 4294901760
    %v277 = vsub.f32 %v28, %v276
    %278 = vmatmul.mubr.f32.gmra.mrb[0].mxu0 %v277
    %v279 = vpop.f32.mrb[0].mxu0
    %v280 = vadd.f32 %v199, %v279
    %v281 = vpop.f32.mrb[0].mxu0
    %282 = vdwg.mxu0
    %283 = vmatprep.subr.mxu0 0.0
    %v284 = vand.u32 %v32, 4294901760
    %285 = vmatpush1.msra.mxu0 %v284
    %286 = vmatprep.subr.mxu0 0.0
    %287 = vmatpush1.msra.mxu0 0.0
    %288 = vmatprep.subr.mxu0 0.0
    %289 = vmatpush1.msra.mxu0 0.0
    %290 = vmatprep.subr.mxu0 0.0
    %291 = vmatpush1.msra.mxu0 0.0
    %292 = vmatprep.subr.mxu0 0.0
    %293 = vmatpush1.msra.mxu0 0.0
    %294 = vmatprep.subr.mxu0 0.0
    %295 = vmatpush1.msra.mxu0 0.0
    %296 = vmatprep.subr.mxu0 0.0
    %297 = vmatpush1.msra.mxu0 0.0
    %298 = vmatprep.subr.mxu0 0.0
    %299 = vmatpush1.msra.mxu0 0.0
    %300 = vmatprep.subr.mxu0 0.0
    %301 = vmatpush1.msra.mxu0 0.0
    %302 = vmatprep.subr.mxu0 0.0
    %303 = vmatpush1.msra.mxu0 0.0
    %304 = vmatprep.subr.mxu0 0.0
    %305 = vmatpush1.msra.mxu0 0.0
    %306 = vmatprep.subr.mxu0 0.0
    %307 = vmatpush1.msra.mxu0 0.0
    %308 = vmatprep.subr.mxu0 0.0
    %309 = vmatpush1.msra.mxu0 0.0
    %310 = vmatprep.subr.mxu0 0.0
    %311 = vmatpush1.msra.mxu0 0.0
    %312 = vmatprep.subr.mxu0 0.0
    %313 = vmatpush1.msra.mxu0 0.0
    %314 = vmatprep.subr.mxu0 0.0
    %315 = vmatpush1.msra.mxu0 0.0
    %316 = vmatprep.subr.mxu0 0.0
    %317 = vmatpush1.msra.mxu0 0.0
    %318 = vmatprep.subr.mxu0 0.0
    %319 = vmatpush1.msra.mxu0 0.0
    %320 = vmatprep.subr.mxu0 0.0
    %321 = vmatpush1.msra.mxu0 0.0
    %322 = vmatprep.subr.mxu0 0.0
    %323 = vmatpush1.msra.mxu0 0.0
    %324 = vmatprep.subr.mxu0 0.0
    %325 = vmatpush1.msra.mxu0 0.0
    %326 = vmatprep.subr.mxu0 0.0
    %327 = vmatpush1.msra.mxu0 0.0
    %328 = vmatprep.subr.mxu0 0.0
    %329 = vmatpush1.msra.mxu0 0.0
    %330 = vmatprep.subr.mxu0 0.0
    %331 = vmatpush1.msra.mxu0 0.0
    %332 = vmatprep.subr.mxu0 0.0
    %333 = vmatpush1.msra.mxu0 0.0
    %334 = vmatprep.subr.mxu0 0.0
    %335 = vmatpush1.msra.mxu0 0.0
    %336 = vmatprep.subr.mxu0 0.0
    %337 = vmatpush1.msra.mxu0 0.0
    %338 = vmatprep.subr.mxu0 0.0
    %339 = vmatpush1.msra.mxu0 0.0
    %340 = vmatprep.subr.mxu0 0.0
    %341 = vmatpush1.msra.mxu0 0.0
    %342 = vmatprep.subr.mxu0 0.0
    %343 = vmatpush1.msra.mxu0 0.0
    %344 = vmatprep.subr.mxu0 0.0
    %345 = vmatpush1.msra.mxu0 0.0
    %346 = vmatprep.subr.mxu0 0.0
    %347 = vmatpush1.msra.mxu0 0.0
    %348 = vmatprep.mubr.f32.mxu0 0.0
    %v349 = vand.u32 %v25, 4294901760
    %v350 = vsub.f32 %v25, %v349
    %v351 = vand.u32 %v350, 4294901760
    %352 = vmatmul.mubr.f32.gmra.mrb[0].mxu0 %v351
    %v353 = vpop.f32.mrb[0].mxu0
    %v354 = vadd.f32 %v273, %v353
    %v355 = vpop.f32.mrb[0].mxu0
    %356 = vmatprep.mubr.f32.mxu0 0.0
    %v357 = vand.u32 %v28, 4294901760
    %v358 = vsub.f32 %v28, %v357
    %v359 = vand.u32 %v358, 4294901760
    %360 = vmatmul.mubr.f32.gmra.mrb[0].mxu0 %v359
    %v361 = vpop.f32.mrb[0].mxu0
    %v362 = vadd.f32 %v280, %v361
    %v363 = vpop.f32.mrb[0].mxu0
    %364 = vdwg.mxu0
    %365 = vmatprep.subr.mxu0 0.0
    %v366 = vand.u32 %v32, 4294901760
    %v367 = vsub.f32 %v32, %v366
    %v368 = vand.u32 %v367, 4294901760
    %369 = vmatpush1.msra.mxu0 %v368
    %370 = vmatprep.subr.mxu0 0.0
    %371 = vmatpush1.msra.mxu0 0.0
    %372 = vmatprep.subr.mxu0 0.0
    %373 = vmatpush1.msra.mxu0 0.0
    %374 = vmatprep.subr.mxu0 0.0
    %375 = vmatpush1.msra.mxu0 0.0
    %376 = vmatprep.subr.mxu0 0.0
    %377 = vmatpush1.msra.mxu0 0.0
    %378 = vmatprep.subr.mxu0 0.0
    %379 = vmatpush1.msra.mxu0 0.0
    %380 = vmatprep.subr.mxu0 0.0
    %381 = vmatpush1.msra.mxu0 0.0
    %382 = vmatprep.subr.mxu0 0.0
    %383 = vmatpush1.msra.mxu0 0.0
    %384 = vmatprep.subr.mxu0 0.0
    %385 = vmatpush1.msra.mxu0 0.0
    %386 = vmatprep.subr.mxu0 0.0
    %387 = vmatpush1.msra.mxu0 0.0
    %388 = vmatprep.subr.mxu0 0.0
    %389 = vmatpush1.msra.mxu0 0.0
    %390 = vmatprep.subr.mxu0 0.0
    %391 = vmatpush1.msra.mxu0 0.0
    %392 = vmatprep.subr.mxu0 0.0
    %393 = vmatpush1.msra.mxu0 0.0
    %394 = vmatprep.subr.mxu0 0.0
    %395 = vmatpush1.msra.mxu0 0.0
    %396 = vmatprep.subr.mxu0 0.0
    %397 = vmatpush1.msra.mxu0 0.0
    %398 = vmatprep.subr.mxu0 0.0
    %399 = vmatpush1.msra.mxu0 0.0
    %400 = vmatprep.subr.mxu0 0.0
    %401 = vmatpush1.msra.mxu0 0.0
    %402 = vmatprep.subr.mxu0 0.0
    %403 = vmatpush1.msra.mxu0 0.0
    %404 = vmatprep.subr.mxu0 0.0
    %405 = vmatpush1.msra.mxu0 0.0
    %406 = vmatprep.subr.mxu0 0.0
    %407 = vmatpush1.msra.mxu0 0.0
    %408 = vmatprep.subr.mxu0 0.0
    %409 = vmatpush1.msra.mxu0 0.0
    %410 = vmatprep.subr.mxu0 0.0
    %411 = vmatpush1.msra.mxu0 0.0
    %412 = vmatprep.subr.mxu0 0.0
    %413 = vmatpush1.msra.mxu0 0.0
    %414 = vmatprep.subr.mxu0 0.0
    %415 = vmatpush1.msra.mxu0 0.0
    %416 = vmatprep.subr.mxu0 0.0
    %417 = vmatpush1.msra.mxu0 0.0
    %418 = vmatprep.subr.mxu0 0.0
    %419 = vmatpush1.msra.mxu0 0.0
    %420 = vmatprep.subr.mxu0 0.0
    %421 = vmatpush1.msra.mxu0 0.0
    %422 = vmatprep.subr.mxu0 0.0
    %423 = vmatpush1.msra.mxu0 0.0
    %424 = vmatprep.subr.mxu0 0.0
    %425 = vmatpush1.msra.mxu0 0.0
    %426 = vmatprep.subr.mxu0 0.0
    %427 = vmatpush1.msra.mxu0 0.0
    %428 = vmatprep.subr.mxu0 0.0
    %429 = vmatpush1.msra.mxu0 0.0
    %430 = vmatprep.subr.mxu0 0.0
    %431 = vmatpush1.msra.mxu0 0.0
    %432 = vmatprep.mubr.f32.mxu0 0.0
    %v433 = vand.u32 %v25, 4294901760
    %434 = vmatmul.mubr.f32.gmra.mrb[0].mxu0 %v433
    %v435 = vpop.f32.mrb[0].mxu0
    %v436 = vadd.f32 %v354, %v435
    %v437 = vpop.f32.mrb[0].mxu0
    %438 = vmatprep.mubr.f32.mxu0 0.0
    %v439 = vand.u32 %v28, 4294901760
    %440 = vmatmul.mubr.f32.gmra.mrb[0].mxu0 %v439
    %v441 = vpop.f32.mrb[0].mxu0
    %v442 = vadd.f32 %v362, %v441
    %v443 = vpop.f32.mrb[0].mxu0
    %444 = vdwg.mxu0
    %445 = vmatprep.subr.mxu0 0.0
    %v446 = vand.u32 %v32, 4294901760
    %447 = vmatpush1.msra.mxu0 %v446
    %448 = vmatprep.subr.mxu0 0.0
    %449 = vmatpush1.msra.mxu0 0.0
    %450 = vmatprep.subr.mxu0 0.0
    %451 = vmatpush1.msra.mxu0 0.0
    %452 = vmatprep.subr.mxu0 0.0
    %453 = vmatpush1.msra.mxu0 0.0
    %454 = vmatprep.subr.mxu0 0.0
    %455 = vmatpush1.msra.mxu0 0.0
    %456 = vmatprep.subr.mxu0 0.0
    %457 = vmatpush1.msra.mxu0 0.0
    %458 = vmatprep.subr.mxu0 0.0
    %459 = vmatpush1.msra.mxu0 0.0
    %460 = vmatprep.subr.mxu0 0.0
    %461 = vmatpush1.msra.mxu0 0.0
    %462 = vmatprep.subr.mxu0 0.0
    %463 = vmatpush1.msra.mxu0 0.0
    %464 = vmatprep.subr.mxu0 0.0
    %465 = vmatpush1.msra.mxu0 0.0
    %466 = vmatprep.subr.mxu0 0.0
    %467 = vmatpush1.msra.mxu0 0.0
    %468 = vmatprep.subr.mxu0 0.0
    %469 = vmatpush1.msra.mxu0 0.0
    %470 = vmatprep.subr.mxu0 0.0
    %471 = vmatpush1.msra.mxu0 0.0
    %472 = vmatprep.subr.mxu0 0.0
    %473 = vmatpush1.msra.mxu0 0.0
    %474 = vmatprep.subr.mxu0 0.0
    %475 = vmatpush1.msra.mxu0 0.0
    %476 = vmatprep.subr.mxu0 0.0
    %477 = vmatpush1.msra.mxu0 0.0
    %478 = vmatprep.subr.mxu0 0.0
    %479 = vmatpush1.msra.mxu0 0.0
    %480 = vmatprep.subr.mxu0 0.0
    %481 = vmatpush1.msra.mxu0 0.0
    %482 = vmatprep.subr.mxu0 0.0
    %483 = vmatpush1.msra.mxu0 0.0
    %484 = vmatprep.subr.mxu0 0.0
    %485 = vmatpush1.msra.mxu0 0.0
    %486 = vmatprep.subr.mxu0 0.0
    %487 = vmatpush1.msra.mxu0 0.0
    %488 = vmatprep.subr.mxu0 0.0
    %489 = vmatpush1.msra.mxu0 0.0
    %490 = vmatprep.subr.mxu0 0.0
    %491 = vmatpush1.msra.mxu0 0.0
    %492 = vmatprep.subr.mxu0 0.0
    %493 = vmatpush1.msra.mxu0 0.0
    %494 = vmatprep.subr.mxu0 0.0
    %495 = vmatpush1.msra.mxu0 0.0
    %496 = vmatprep.subr.mxu0 0.0
    %497 = vmatpush1.msra.mxu0 0.0
    %498 = vmatprep.subr.mxu0 0.0
    %499 = vmatpush1.msra.mxu0 0.0
    %500 = vmatprep.subr.mxu0 0.0
    %501 = vmatpush1.msra.mxu0 0.0
    %502 = vmatprep.subr.mxu0 0.0
    %503 = vmatpush1.msra.mxu0 0.0
    %504 = vmatprep.subr.mxu0 0.0
    %505 = vmatpush1.msra.mxu0 0.0
    %506 = vmatprep.subr.mxu0 0.0
    %507 = vmatpush1.msra.mxu0 0.0
    %508 = vmatprep.subr.mxu0 0.0
    %509 = vmatpush1.msra.mxu0 0.0
    %510 = vmatprep.mubr.f32.mxu0 0.0
    %v511 = vand.u32 %v25, 4294901760
    %512 = vmatmul.mubr.f32.gmra.mrb[0].mxu0 %v511
    %v513 = vpop.f32.mrb[0].mxu0
    %v514 = vadd.f32 %v436, %v513
    %v515 = vpop.f32.mrb[0].mxu0
    %516 = vmatprep.mubr.f32.mxu0 0.0
    %v517 = vand.u32 %v28, 4294901760
    %518 = vmatmul.mubr.f32.gmra.mrb[0].mxu0 %v517
    %v519 = vpop.f32.mrb[0].mxu0
    %v520 = vadd.f32 %v442, %v519
    %v521 = vpop.f32.mrb[0].mxu0
    %522 = vdwg.mxu0
    %v523 = vld [vmem:[%s1] sm:$0x1]
    %v525 = vlaneseq
    %v526 = vshrl.u32 %v525, 7
    %v527 = vsub.s32 0, %v526
    %v528 = vrot.slane %v523, %v527
    %v530 = vmul.f32 %v514, %v528
    %v531 = vmul.f32 %v520, %v528
    %v532 = vand.u32 2147483647, %v530
    %vm533 = vcmp.le.f32.partialorder %v532, 0.7853982
    %vm534 = vcmp.lt.s32.totalorder %v530, 0
    %v535 = vand.u32 %v530, 2139095040
    %v536 = vshrl.u32 %v535, 23
    %v537 = vsub.s32 %v536, 127
    %v538 = vand.u32 2147483647, %v530
    %v539 = vand.u32 %v538, 8388607
    %v540 = vor.u32 %v539, 8388608
    %v541 = vsub.s32 0, %v540
    %v542 = vadd.s32 %v537, 1
    %vm543 = vcmp.gt.s32.totalorder %v542, 0
    %v544 = vsel %vm543, %v542, 0
    %v545 = vshrl.u32 %v544, 5
    %v546 = vand.u32 %v544, 31
    %v547 = vsub.s32 32, %v546
    %v548 = vshrl.u32 683565275, %v547
    %v549 = vshll.u32 683565275, %v546
    %v550 = vshrl.u32 2475754826, %v547
    %v551 = vor.u32 %v549, %v550
    %v552 = vshll.u32 2475754826, %v546
    %v553 = vshrl.u32 2131351028, %v547
    %v554 = vor.u32 %v552, %v553
    %v555 = vshll.u32 2131351028, %v546
    %v556 = vshrl.u32 2102212464, %v547
    %v557 = vor.u32 %v555, %v556
    %v558 = vshll.u32 2102212464, %v546
    %v559 = vshrl.u32 920167782, %v547
    %v560 = vor.u32 %v558, %v559
    %v561 = vshll.u32 920167782, %v546
    %v562 = vshrl.u32 1326507024, %v547
    %v563 = vor.u32 %v561, %v562
    %vm564 = vcmp.lt.s32.totalorder %v545, 1
    %vm565 = vcmp.lt.s32.totalorder %v545, 2
    %vm566 = vcmp.lt.s32.totalorder %v545, 3
    %vm567 = vcmp.lt.s32.totalorder %v545, 4
    %v568 = vsel %vm564, %v548, %v551
    %v569 = vsel %vm567, %v557, 2102212464
    %v570 = vsel %vm566, %v554, %v569
    %v571 = vsel %vm565, %v568, %v570
    %v572 = vsel %vm564, %v551, %v554
    %v573 = vsel %vm567, %v560, 920167782
    %v574 = vsel %vm566, %v557, %v573
    %v575 = vsel %vm565, %v572, %v574
    %v576 = vsel %vm564, %v554, %v557
    %v577 = vsel %vm567, %v563, 1326507024
    %v578 = vsel %vm566, %v560, %v577
    %v579 = vsel %vm565, %v576, %v578
    %v580 = vshll.u32 %v540, 8
    %v581 = vmul.u32.u64.compose %v580, %v579
    %v582 = vextract.low.u32 %v581
    %v583 = vextract.high.u32 %v581
    %v584 = vmul.u32.u64.compose %v580, %v575
    %v585 = vextract.low.u32 %v584
    %v586 = vextract.high.u32 %v584
    %v587 = vmul.u32 %v580, %v571
    %v588 = vadd.s32 %v583, %v585
    %vm589 = vc.u32 %v583, %v585
    %v590 = vadd.s32 %v586, 1
    %v591 = vsel %vm589, %v590, %v586
    %v592 = vadd.s32 %v587, %v591
    %v593 = vadd.s32 %v592, 536870912
    %v594 = vshrl.u32 %v593, 30
    %v595 = vshll.u32 %v594, 30
    %v596 = vsub.s32 %v592, %v595
    %vm597 = vcmp.lt.s32.totalorder %v596, 0
    %v598 = vsub.s32 0, %v596
    %v599 = vsel %vm597, %v598, %v596
    %v600 = vclz %v599
    %v601 = vsub.s32 %v600, 2
    %vm602 = vcmp.gt.s32.totalorder 0, %v601
    %v603 = vsel %vm602, 0, %v601
    %v604 = vsub.s32 32, %v603
    %v605 = vshll.u32 %v596, %v603
    %v606 = vshrl.u32 %v588, %v604
    %v607 = vor.u32 %v605, %v606
    %v608 = vsub.s32 4294967266, %v603
    %v609 = vadd.s32 %v608, 127
    %v610 = vshll.u32 %v609, 23
    %v611 = vor.u32 4788187, %v610
    %v612 = vand.u32 2147483647, %v611
    %v614 = vcvt.s32.f32 %v607
    %v615 = vmul.f32 %v614, %v612
    %v616 = vxor.u32 %v615, 2147483648
    %v617 = vsel %vm534, %v616, %v615
    %v618 = vsub.s32 4, %v594
    %v619 = vsel %vm534, %v618, %v594
    %v620 = vsel %vm533, %v530, %v617
    %v621 = vsel %vm533, 0, %v619
    %v622 = vcosq.f32.pop %v620
    %v623 = vsinq.f32.pop %v620
    %vm624 = vweird.f32 %v530
    %v625 = vand.u32 %v621, 3
    %vm626 = vcmp.lt.s32.totalorder %v625, 2
    %vm627 = vcmp.eq.s32.totalorder %v625, 0
    %v628 = vxor.u32 %v623, 2147483648
    %v629 = vsel %vm627, %v622, %v628
    %vm630 = vcmp.eq.s32.totalorder %v625, 2
    %v631 = vxor.u32 %v622, 2147483648
    %v632 = vsel %vm630, %v631, %v623
    %v633 = vsel %vm626, %v629, %v632
    %v634 = vsel %vm624, nan, %v633
    %v635 = vand.u32 2147483647, %v531
    %vm636 = vcmp.le.f32.partialorder %v635, 0.7853982
    %vm637 = vcmp.lt.s32.totalorder %v531, 0
    %v638 = vand.u32 %v531, 2139095040
    %v639 = vshrl.u32 %v638, 23
    %v640 = vsub.s32 %v639, 127
    %v641 = vand.u32 2147483647, %v531
    %v642 = vand.u32 %v641, 8388607
    %v643 = vor.u32 %v642, 8388608
    %v644 = vsub.s32 0, %v643
    %v645 = vadd.s32 %v640, 1
    %vm646 = vcmp.gt.s32.totalorder %v645, 0
    %v647 = vsel %vm646, %v645, 0
    %v648 = vshrl.u32 %v647, 5
    %v649 = vand.u32 %v647, 31
    %v650 = vsub.s32 32, %v649
    %v651 = vshrl.u32 683565275, %v650
    %v652 = vshll.u32 683565275, %v649
    %v653 = vshrl.u32 2475754826, %v650
    %v654 = vor.u32 %v652, %v653
    %v655 = vshll.u32 2475754826, %v649
    %v656 = vshrl.u32 2131351028, %v650
    %v657 = vor.u32 %v655, %v656
    %v658 = vshll.u32 2131351028, %v649
    %v659 = vshrl.u32 2102212464, %v650
    %v660 = vor.u32 %v658, %v659
    %v661 = vshll.u32 2102212464, %v649
    %v662 = vshrl.u32 920167782, %v650
    %v663 = vor.u32 %v661, %v662
    %v664 = vshll.u32 920167782, %v649
    %v665 = vshrl.u32 1326507024, %v650
    %v666 = vor.u32 %v664, %v665
    %vm667 = vcmp.lt.s32.totalorder %v648, 1
    %vm668 = vcmp.lt.s32.totalorder %v648, 2
    %vm669 = vcmp.lt.s32.totalorder %v648, 3
    %vm670 = vcmp.lt.s32.totalorder %v648, 4
    %v671 = vsel %vm667, %v651, %v654
    %v672 = vsel %vm670, %v660, 2102212464
    %v673 = vsel %vm669, %v657, %v672
    %v674 = vsel %vm668, %v671, %v673
    %v675 = vsel %vm667, %v654, %v657
    %v676 = vsel %vm670, %v663, 920167782
    %v677 = vsel %vm669, %v660, %v676
    %v678 = vsel %vm668, %v675, %v677
    %v679 = vsel %vm667, %v657, %v660
    %v680 = vsel %vm670, %v666, 1326507024
    %v681 = vsel %vm669, %v663, %v680
    %v682 = vsel %vm668, %v679, %v681
    %v683 = vshll.u32 %v643, 8
    %v684 = vmul.u32.u64.compose %v683, %v682
    %v685 = vextract.low.u32 %v684
    %v686 = vextract.high.u32 %v684
    %v687 = vmul.u32.u64.compose %v683, %v678
    %v688 = vextract.low.u32 %v687
    %v689 = vextract.high.u32 %v687
    %v690 = vmul.u32 %v683, %v674
    %v691 = vadd.s32 %v686, %v688
    %vm692 = vc.u32 %v686, %v688
    %v693 = vadd.s32 %v689, 1
    %v694 = vsel %vm692, %v693, %v689
    %v695 = vadd.s32 %v690, %v694
    %v696 = vadd.s32 %v695, 536870912
    %v697 = vshrl.u32 %v696, 30
    %v698 = vshll.u32 %v697, 30
    %v699 = vsub.s32 %v695, %v698
    %vm700 = vcmp.lt.s32.totalorder %v699, 0
    %v701 = vsub.s32 0, %v699
    %v702 = vsel %vm700, %v701, %v699
    %v703 = vclz %v702
    %v704 = vsub.s32 %v703, 2
    %vm705 = vcmp.gt.s32.totalorder 0, %v704
    %v706 = vsel %vm705, 0, %v704
    %v707 = vsub.s32 32, %v706
    %v708 = vshll.u32 %v699, %v706
    %v709 = vshrl.u32 %v691, %v707
    %v710 = vor.u32 %v708, %v709
    %v711 = vsub.s32 4294967266, %v706
    %v712 = vadd.s32 %v711, 127
    %v713 = vshll.u32 %v712, 23
    %v714 = vor.u32 4788187, %v713
    %v715 = vand.u32 2147483647, %v714
    %v717 = vcvt.s32.f32 %v710
    %v718 = vmul.f32 %v717, %v715
    %v719 = vxor.u32 %v718, 2147483648
    %v720 = vsel %vm637, %v719, %v718
    %v721 = vsub.s32 4, %v697
    %v722 = vsel %vm637, %v721, %v697
    %v723 = vsel %vm636, %v531, %v720
    %v724 = vsel %vm636, 0, %v722
    %v725 = vcosq.f32.pop %v723
    %v726 = vsinq.f32.pop %v723
    %vm727 = vweird.f32 %v531
    %v728 = vand.u32 %v724, 3
    %vm729 = vcmp.lt.s32.totalorder %v728, 2
    %vm730 = vcmp.eq.s32.totalorder %v728, 0
    %v731 = vxor.u32 %v726, 2147483648
    %v732 = vsel %vm730, %v725, %v731
    %vm733 = vcmp.eq.s32.totalorder %v728, 2
    %v734 = vxor.u32 %v725, 2147483648
    %v735 = vsel %vm733, %v734, %v726
    %v736 = vsel %vm729, %v732, %v735
    %v737 = vsel %vm727, nan, %v736
    %v738 = vand.u32 2147483647, %v530
    %vm739 = vcmp.le.f32.partialorder %v738, 0.7853982
    %vm740 = vcmp.lt.s32.totalorder %v530, 0
    %v741 = vand.u32 %v530, 2139095040
    %v742 = vshrl.u32 %v741, 23
    %v743 = vsub.s32 %v742, 127
    %v744 = vand.u32 2147483647, %v530
    %v745 = vand.u32 %v744, 8388607
    %v746 = vor.u32 %v745, 8388608
    %v747 = vsub.s32 0, %v746
    %v748 = vadd.s32 %v743, 1
    %vm749 = vcmp.gt.s32.totalorder %v748, 0
    %v750 = vsel %vm749, %v748, 0
    %v751 = vshrl.u32 %v750, 5
    %v752 = vand.u32 %v750, 31
    %v753 = vsub.s32 32, %v752
    %v754 = vshrl.u32 683565275, %v753
    %v755 = vshll.u32 683565275, %v752
    %v756 = vshrl.u32 2475754826, %v753
    %v757 = vor.u32 %v755, %v756
    %v758 = vshll.u32 2475754826, %v752
    %v759 = vshrl.u32 2131351028, %v753
    %v760 = vor.u32 %v758, %v759
    %v761 = vshll.u32 2131351028, %v752
    %v762 = vshrl.u32 2102212464, %v753
    %v763 = vor.u32 %v761, %v762
    %v764 = vshll.u32 2102212464, %v752
    %v765 = vshrl.u32 920167782, %v753
    %v766 = vor.u32 %v764, %v765
    %v767 = vshll.u32 920167782, %v752
    %v768 = vshrl.u32 1326507024, %v753
    %v769 = vor.u32 %v767, %v768
    %vm770 = vcmp.lt.s32.totalorder %v751, 1
    %vm771 = vcmp.lt.s32.totalorder %v751, 2
    %vm772 = vcmp.lt.s32.totalorder %v751, 3
    %vm773 = vcmp.lt.s32.totalorder %v751, 4
    %v774 = vsel %vm770, %v754, %v757
    %v775 = vsel %vm773, %v763, 2102212464
    %v776 = vsel %vm772, %v760, %v775
    %v777 = vsel %vm771, %v774, %v776
    %v778 = vsel %vm770, %v757, %v760
    %v779 = vsel %vm773, %v766, 920167782
    %v780 = vsel %vm772, %v763, %v779
    %v781 = vsel %vm771, %v778, %v780
    %v782 = vsel %vm770, %v760, %v763
    %v783 = vsel %vm773, %v769, 1326507024
    %v784 = vsel %vm772, %v766, %v783
    %v785 = vsel %vm771, %v782, %v784
    %v786 = vshll.u32 %v746, 8
    %v787 = vmul.u32.u64.compose %v786, %v785
    %v788 = vextract.low.u32 %v787
    %v789 = vextract.high.u32 %v787
    %v790 = vmul.u32.u64.compose %v786, %v781
    %v791 = vextract.low.u32 %v790
    %v792 = vextract.high.u32 %v790
    %v793 = vmul.u32 %v786, %v777
    %v794 = vadd.s32 %v789, %v791
    %vm795 = vc.u32 %v789, %v791
    %v796 = vadd.s32 %v792, 1
    %v797 = vsel %vm795, %v796, %v792
    %v798 = vadd.s32 %v793, %v797
    %v799 = vadd.s32 %v798, 536870912
    %v800 = vshrl.u32 %v799, 30
    %v801 = vshll.u32 %v800, 30
    %v802 = vsub.s32 %v798, %v801
    %vm803 = vcmp.lt.s32.totalorder %v802, 0
    %v804 = vsub.s32 0, %v802
    %v805 = vsel %vm803, %v804, %v802
    %v806 = vclz %v805
    %v807 = vsub.s32 %v806, 2
    %vm808 = vcmp.gt.s32.totalorder 0, %v807
    %v809 = vsel %vm808, 0, %v807
    %v810 = vsub.s32 32, %v809
    %v811 = vshll.u32 %v802, %v809
    %v812 = vshrl.u32 %v794, %v810
    %v813 = vor.u32 %v811, %v812
    %v814 = vsub.s32 4294967266, %v809
    %v815 = vadd.s32 %v814, 127
    %v816 = vshll.u32 %v815, 23
    %v817 = vor.u32 4788187, %v816
    %v818 = vand.u32 2147483647, %v817
    %v820 = vcvt.s32.f32 %v813
    %v821 = vmul.f32 %v820, %v818
    %v822 = vxor.u32 %v821, 2147483648
    %v823 = vsel %vm740, %v822, %v821
    %v824 = vsub.s32 4, %v800
    %v825 = vsel %vm740, %v824, %v800
    %v826 = vsel %vm739, %v530, %v823
    %v827 = vsel %vm739, 0, %v825
    %v828 = vcosq.f32.pop %v826
    %v829 = vsinq.f32.pop %v826
    %vm830 = vweird.f32 %v530
    %v831 = vadd.s32 %v827, 3
    %v832 = vand.u32 %v831, 3
    %vm833 = vcmp.lt.s32.totalorder %v832, 2
    %vm834 = vcmp.eq.s32.totalorder %v832, 0
    %v835 = vxor.u32 %v829, 2147483648
    %v836 = vsel %vm834, %v828, %v835
    %vm837 = vcmp.eq.s32.totalorder %v832, 2
    %v838 = vxor.u32 %v828, 2147483648
    %v839 = vsel %vm837, %v838, %v829
    %v840 = vsel %vm833, %v836, %v839
    %v841 = vsel %vm830, nan, %v840
    %v842 = vand.u32 2147483647, %v531
    %vm843 = vcmp.le.f32.partialorder %v842, 0.7853982
    %vm844 = vcmp.lt.s32.totalorder %v531, 0
    %v845 = vand.u32 %v531, 2139095040
    %v846 = vshrl.u32 %v845, 23
    %v847 = vsub.s32 %v846, 127
    %v848 = vand.u32 2147483647, %v531
    %v849 = vand.u32 %v848, 8388607
    %v850 = vor.u32 %v849, 8388608
    %v851 = vsub.s32 0, %v850
    %v852 = vadd.s32 %v847, 1
    %vm853 = vcmp.gt.s32.totalorder %v852, 0
    %v854 = vsel %vm853, %v852, 0
    %v855 = vshrl.u32 %v854, 5
    %v856 = vand.u32 %v854, 31
    %v857 = vsub.s32 32, %v856
    %v858 = vshrl.u32 683565275, %v857
    %v859 = vshll.u32 683565275, %v856
    %v860 = vshrl.u32 2475754826, %v857
    %v861 = vor.u32 %v859, %v860
    %v862 = vshll.u32 2475754826, %v856
    %v863 = vshrl.u32 2131351028, %v857
    %v864 = vor.u32 %v862, %v863
    %v865 = vshll.u32 2131351028, %v856
    %v866 = vshrl.u32 2102212464, %v857
    %v867 = vor.u32 %v865, %v866
    %v868 = vshll.u32 2102212464, %v856
    %v869 = vshrl.u32 920167782, %v857
    %v870 = vor.u32 %v868, %v869
    %v871 = vshll.u32 920167782, %v856
    %v872 = vshrl.u32 1326507024, %v857
    %v873 = vor.u32 %v871, %v872
    %vm874 = vcmp.lt.s32.totalorder %v855, 1
    %vm875 = vcmp.lt.s32.totalorder %v855, 2
    %vm876 = vcmp.lt.s32.totalorder %v855, 3
    %vm877 = vcmp.lt.s32.totalorder %v855, 4
    %v878 = vsel %vm874, %v858, %v861
    %v879 = vsel %vm877, %v867, 2102212464
    %v880 = vsel %vm876, %v864, %v879
    %v881 = vsel %vm875, %v878, %v880
    %v882 = vsel %vm874, %v861, %v864
    %v883 = vsel %vm877, %v870, 920167782
    %v884 = vsel %vm876, %v867, %v883
    %v885 = vsel %vm875, %v882, %v884
    %v886 = vsel %vm874, %v864, %v867
    %v887 = vsel %vm877, %v873, 1326507024
    %v888 = vsel %vm876, %v870, %v887
    %v889 = vsel %vm875, %v886, %v888
    %v890 = vshll.u32 %v850, 8
    %v891 = vmul.u32.u64.compose %v890, %v889
    %v892 = vextract.low.u32 %v891
    %v893 = vextract.high.u32 %v891
    %v894 = vmul.u32.u64.compose %v890, %v885
    %v895 = vextract.low.u32 %v894
    %v896 = vextract.high.u32 %v894
    %v897 = vmul.u32 %v890, %v881
    %v898 = vadd.s32 %v893, %v895
    %vm899 = vc.u32 %v893, %v895
    %v900 = vadd.s32 %v896, 1
    %v901 = vsel %vm899, %v900, %v896
    %v902 = vadd.s32 %v897, %v901
    %v903 = vadd.s32 %v902, 536870912
    %v904 = vshrl.u32 %v903, 30
    %v905 = vshll.u32 %v904, 30
    %v906 = vsub.s32 %v902, %v905
    %vm907 = vcmp.lt.s32.totalorder %v906, 0
    %v908 = vsub.s32 0, %v906
    %v909 = vsel %vm907, %v908, %v906
    %v910 = vclz %v909
    %v911 = vsub.s32 %v910, 2
    %vm912 = vcmp.gt.s32.totalorder 0, %v911
    %v913 = vsel %vm912, 0, %v911
    %v914 = vsub.s32 32, %v913
    %v915 = vshll.u32 %v906, %v913
    %v916 = vshrl.u32 %v898, %v914
    %v917 = vor.u32 %v915, %v916
    %v918 = vsub.s32 4294967266, %v913
    %v919 = vadd.s32 %v918, 127
    %v920 = vshll.u32 %v919, 23
    %v921 = vor.u32 4788187, %v920
    %v922 = vand.u32 2147483647, %v921
    %v924 = vcvt.s32.f32 %v917
    %v925 = vmul.f32 %v924, %v922
    %v926 = vxor.u32 %v925, 2147483648
    %v927 = vsel %vm844, %v926, %v925
    %v928 = vsub.s32 4, %v904
    %v929 = vsel %vm844, %v928, %v904
    %v930 = vsel %vm843, %v531, %v927
    %v931 = vsel %vm843, 0, %v929
    %v932 = vcosq.f32.pop %v930
    %v933 = vsinq.f32.pop %v930
    %vm934 = vweird.f32 %v531
    %v935 = vadd.s32 %v931, 3
    %v936 = vand.u32 %v935, 3
    %vm937 = vcmp.lt.s32.totalorder %v936, 2
    %vm938 = vcmp.eq.s32.totalorder %v936, 0
    %v939 = vxor.u32 %v933, 2147483648
    %v940 = vsel %vm938, %v932, %v939
    %vm941 = vcmp.eq.s32.totalorder %v936, 2
    %v942 = vxor.u32 %v932, 2147483648
    %v943 = vsel %vm941, %v942, %v933
    %v944 = vsel %vm937, %v940, %v943
    %v945 = vsel %vm934, nan, %v944
    %946 = vst [vmem:[#allocation2] sm:$0xff] %v634
    %947 = vst [vmem:[#allocation2 + $0x8] sm:$0xff] %v737
    %948 = vst [vmem:[#allocation4] sm:$0xff] %v841
    %949 = vst [vmem:[#allocation4 + $0x8] sm:$0xff] %v945
    // Predicated region
    $region14: #{tpu_custom_call.1} parent=1 // pred_check
      _
    $region15: #{tpu_custom_call.1} parent=1 // pred_check_branch
      %951 = sbr.rel (0) target = $region17
    $region16: #{tpu_custom_call.1} parent=1 // pred_region
      %s953 = ssub.s32 256, 256
      %954 = vsyncadd [#allocation3], %s953
      %s955 = sshll.u32 [#allocation2], 4
      %s956 = int_to_ptr.vmem [resolvable:$true] %s955
      %961 = dma.vmem_to_hbm [thread:$0]  %s956, 256, %s3, [#allocation3], 128, 128, 8
    $region17: #{tpu_custom_call.1} parent=1 // pred_fallthru
      _
    // Predicated region
    $region18: #{tpu_custom_call.1} parent=1 // pred_check
      _
    $region19: #{tpu_custom_call.1} parent=1 // pred_check_branch
      %963 = sbr.rel (0) target = $region21
    $region20: #{tpu_custom_call.1} parent=1 // pred_region
      %s965 = ssub.s32 256, 256
      %966 = vsyncadd [#allocation5], %s965
      %s967 = sshll.u32 [#allocation4], 4
      %s968 = int_to_ptr.vmem [resolvable:$true] %s967
      %973 = dma.vmem_to_hbm [thread:$0]  %s968, 256, %s4, [#allocation5], 128, 128, 8
    $region21: #{tpu_custom_call.1} parent=1 // pred_fallthru
      _
    // Predicated region
    $region22: #{tpu_custom_call.1} parent=1 // pred_check
      _
    $region23: #{tpu_custom_call.1} parent=1 // pred_check_branch
      %975 = sbr.rel (0) target = $region25
    $region24: #{tpu_custom_call.1} parent=1 // pred_region
      %976 = dma.done [#allocation3], 256
    $region25: #{tpu_custom_call.1} parent=1 // pred_fallthru
      _
    // Predicated region
    $region26: #{tpu_custom_call.1} parent=1 // pred_check
      _
    $region27: #{tpu_custom_call.1} parent=1 // pred_check_branch
      %978 = sbr.rel (0) target = $region29
    $region28: #{tpu_custom_call.1} parent=1 // pred_region
      %979 = dma.done [#allocation5], 256
    $region29: #{tpu_custom_call.1} parent=1 // pred_fallthru
      _
    %980 = vsyncpa [#allocation3], 1
    %981 = vsyncpa [#allocation5], 1

</llo_original>
